<compile_context>
chip_gen: v7x
topology: tpu7x:2x2x1
jax: 0.10.0
libtpu: 0.0.40
codegen_flags: <defaults>
</compile_context>

<pallas_src>
import functools

import jax
import jax.numpy as jnp
from jax import lax
from jax.experimental import pallas as pl
from jax.experimental.pallas import tpu as pltpu


def _binconv_kernel(a_ref, b_hi_ref, b_lo_ref, o_ref):
    """o = relu(A @ (B_hi + B_lo)); A is pre-binarized bf16, full-K block."""
    a = a_ref[...]                                             # (tm, K) bf16, {-1,0,+1}
    acc = jnp.dot(a, b_hi_ref[...], preferred_element_type=jnp.float32)
    acc = acc + jnp.dot(a, b_lo_ref[...], preferred_element_type=jnp.float32)
    o_ref[...] = jnp.maximum(acc, 0.0).astype(o_ref.dtype)     # nn.ReLU


def _pick_tm(M):
    # Largest tile that divides M (no pad copy) while keeping >= 2 grid
    # programs so the second v7x TensorCore gets work.
    for cand in (1024, 512, 256, 128):
        if M % cand == 0 and M // cand >= 2:
            return cand
    for cand in (1024, 512, 256, 128):
        if M % cand == 0:
            return cand
    return 256  # ragged M: pad up to a multiple of 256


def _pick_tn(OC):
    if OC % 256 == 0:
        return 256
    if OC % 128 == 0:
        return 128
    return OC   # full-dim output block (allowed for any size)


def _pallas_bin_matmul_relu(a_bin, w_hi, w_lo, out_dtype):
    """relu(a_bin @ (w_hi + w_lo)). a_bin: (M, K) bf16; w_*: (K, OC) bf16."""
    M, K = a_bin.shape
    K2, OC = w_hi.shape
    assert K == K2

    tm = _pick_tm(M)
    tn = _pick_tn(OC)

    Mp = pl.cdiv(M, tm) * tm
    if Mp != M:                       # only pad when tm does not divide M
        a_bin = jnp.zeros((Mp, K), a_bin.dtype).at[:M].set(a_bin)

    grid = (Mp // tm, OC // tn)

    # VMEM footprint estimate: double-buffered A tile + hi/lo B tiles + output.
    # Only raise the scoped VMEM limit when actually needed; cap at 48 MiB so
    # the same config fits the 64 MiB v7x VMEM as well as v5e/v6e.
    est = (2 * tm * K * 2) + (4 * K * tn * 2) + (2 * tm * tn * jnp.dtype(out_dtype).itemsize)
    cp_kwargs = dict(dimension_semantics=("parallel", "parallel"))
    if est > 24 * 1024 * 1024:
        cp_kwargs["vmem_limit_bytes"] = min(2 * est, 48 * 1024 * 1024)

    out = pl.pallas_call(
        _binconv_kernel,
        out_shape=jax.ShapeDtypeStruct((Mp, OC), out_dtype),
        grid_spec=pltpu.PrefetchScalarGridSpec(
            num_scalar_prefetch=0,
            grid=grid,
            in_specs=[
                pl.BlockSpec((tm, K), lambda i, j: (i, 0)),   # A tile, full K
                pl.BlockSpec((K, tn), lambda i, j: (0, j)),   # W_hi, VMEM-resident per j
                pl.BlockSpec((K, tn), lambda i, j: (0, j)),   # W_lo, VMEM-resident per j
            ],
            out_specs=pl.BlockSpec((tm, tn), lambda i, j: (i, j)),
        ),
        compiler_params=pltpu.CompilerParams(**cp_kwargs),
    )(a_bin, w_hi, w_lo)
    return out[:M]


def _im2col_nchw(x, kh, kw, stride, padding):
    """x: (N, C, H, W) -> patches (N*OH*OW, C*KH*KW), K ordered (c, kh, kw)."""
    n, c, h, w = x.shape
    oh = (h + 2 * padding - kh) // stride + 1
    ow = (w + 2 * padding - kw) // stride + 1
    xp = jnp.pad(x, ((0, 0), (0, 0), (padding, padding), (padding, padding)))
    cols = []
    for i in range(kh):
        for j in range(kw):
            sl = xp[:, :, i:i + (oh - 1) * stride + 1:stride,
                          j:j + (ow - 1) * stride + 1:stride]
            cols.append(sl)                                    # (N, C, OH, OW)
    patches = jnp.stack(cols, axis=0)                          # (KH*KW, N, C, OH, OW)
    patches = jnp.transpose(patches, (1, 3, 4, 2, 0))          # (N, OH, OW, C, KH*KW)
    return patches.reshape(n * oh * ow, c * kh * kw), oh, ow


@functools.partial(jax.jit, static_argnames=("stride", "padding"))
def bin_conv2d(x, weight, *, stride=1, padding=0):
    """BinConv2d.forward: relu(conv2d(sign(x), weight)).  NCHW / OIHW."""
    n, c, h, w = x.shape
    oc, ic, kh, kw = weight.shape
    assert ic == c

    # BinActive: binarize ONCE in the wrapper.  sign(x) in {-1,0,+1} is exact
    # in bf16, so patches are built in bf16 (half the f32 HBM traffic), and the
    # kernel never re-computes sign() across output tiles.  sign(0)=0 keeps the
    # zero spatial padding (and any M-tile padding) inert in the matmul.
    x_bin = jnp.sign(x).astype(jnp.bfloat16)
    patches, oh, ow = _im2col_nchw(x_bin, kh, kw, stride, padding)   # (M, K) bf16

    # hi/lo bf16 split of the f32 weights: A@(W_hi+W_lo) on the bf16 MXU path
    # recovers near-f32 accuracy while avoiding the slow f32 matmul path.
    w_mat = weight.reshape(oc, c * kh * kw).T                        # (K, OC) f32
    w_hi = w_mat.astype(jnp.bfloat16)
    w_lo = (w_mat - w_hi.astype(jnp.float32)).astype(jnp.bfloat16)

    y = _pallas_bin_matmul_relu(patches, w_hi, w_lo, x.dtype)        # (M, OC)
    y = y.reshape(n, oh, ow, oc)                                     # NHWC
    # Keep the PyTorch module's NCHW output layout.  (Drop this transpose if a
    # downstream consumer accepts NHWC.)
    return jnp.transpose(y, (0, 3, 1, 2))


if __name__ == "__main__":
    key = jax.random.PRNGKey(0)
    kx, kw_ = jax.random.split(key)

    # Small shapes consistent with the module: in_ch=4, out_ch=8, k=3, s=1, p=1
    N, C, H, W = 2, 4, 16, 16
    OC, KH, KW = 8, 3, 3
    stride, padding = 1, 1

    x = jax.random.normal(kx, (N, C, H, W), dtype=jnp.float32)
    weight = jax.random.normal(kw_, (OC, C, KH, KW), dtype=jnp.float32) * 0.1

    out = bin_conv2d(x, weight, stride=stride, padding=padding)
    out = jax.block_until_ready(out)

    # Reference (plain JAX, f32-accurate conv) for a sanity check.
    ref = lax.conv_general_dilated(
        jnp.sign(x), weight, (stride, stride),
        [(padding, padding), (padding, padding)],
        dimension_numbers=("NCHW", "OIHW", "NCHW"),
        precision=lax.Precision.HIGHEST)
    ref = jnp.maximum(ref, 0.0)

    assert out.shape == ref.shape == (N, OC, H, W)
    assert jnp.allclose(out, ref, atol=5e-4, rtol=5e-4)
    print("KERNEL_OK")
</pallas_src>

<mosaic_0001>
module attributes {stable_mosaic.version = 11 : i64} {
  func.func @_binconv_kernel(%arg0: i32, %arg1: i32, %arg2: memref<256x36xbf16, #tpu.memory_space<vmem>>, %arg3: memref<36x8xbf16, #tpu.memory_space<vmem>>, %arg4: memref<36x8xbf16, #tpu.memory_space<vmem>>, %arg5: memref<256x8xf32, #tpu.memory_space<vmem>>) attributes {dimension_semantics = [#tpu.dimension_semantics<parallel>, #tpu.dimension_semantics<parallel>], iteration_bounds = array<i64: 2, 1>, scalar_prefetch = 0 : i64, scratch_operands = 0 : i64, tpu.core_type = #tpu.core_type<tc>, window_params = [{transform_indices = @transform_0, window_bounds = array<i64: 256, 36>}, {transform_indices = @transform_1, window_bounds = array<i64: 36, 8>}, {transform_indices = @transform_2, window_bounds = array<i64: 36, 8>}, {transform_indices = @transform_3, window_bounds = array<i64: 256, 8>}]} {
    %c0 = arith.constant 0 : index
    %c0_0 = arith.constant 0 : index
    %0 = vector.load %arg2[%c0, %c0_0] : memref<256x36xbf16, #tpu.memory_space<vmem>>, vector<256x36xbf16>
    %c0_1 = arith.constant 0 : index
    %c0_2 = arith.constant 0 : index
    %1 = vector.load %arg3[%c0_1, %c0_2] : memref<36x8xbf16, #tpu.memory_space<vmem>>, vector<36x8xbf16>
    %cst = arith.constant dense<0.000000e+00> : vector<256x8xf32>
    %2 = tpu.matmul %0, %1, %cst {dimension_numbers = #tpu.dot_dimension_numbers<[1], [0], [0], [1], [0, 0, 1, 1], [], []>} : vector<256x36xbf16>, vector<36x8xbf16>, vector<256x8xf32> -> vector<256x8xf32>
    %c0_3 = arith.constant 0 : index
    %c0_4 = arith.constant 0 : index
    %3 = vector.load %arg4[%c0_3, %c0_4] : memref<36x8xbf16, #tpu.memory_space<vmem>>, vector<36x8xbf16>
    %cst_5 = arith.constant dense<0.000000e+00> : vector<256x8xf32>
    %4 = tpu.matmul %0, %3, %cst_5 {dimension_numbers = #tpu.dot_dimension_numbers<[1], [0], [0], [1], [0, 0, 1, 1], [], []>} : vector<256x36xbf16>, vector<36x8xbf16>, vector<256x8xf32> -> vector<256x8xf32>
    %5 = arith.addf %2, %4 : vector<256x8xf32>
    %cst_6 = arith.constant 0.000000e+00 : f32
    %6 = vector.broadcast %cst_6 : f32 to vector<256x8xf32>
    %7 = arith.maximumf %5, %6 : vector<256x8xf32>
    %c0_7 = arith.constant 0 : index
    %c0_8 = arith.constant 0 : index
    %8 = vector.load %arg5[%c0_7, %c0_8] : memref<256x8xf32, #tpu.memory_space<vmem>>, vector<256x8xf32>
    tpu.vector_store %arg5[%c0_7, %c0_8], %7 {strides = array<i32>} : memref<256x8xf32, #tpu.memory_space<vmem>>, vector<256x8xf32>,
    return
  }
  func.func @transform_0(%arg0: i32, %arg1: i32) -> (i32, i32) {
    %c0_i32 = arith.constant 0 : i32
    %c0_i32_0 = arith.constant 0 : i32
    return %arg0, %c0_i32 : i32, i32
  }
  func.func @transform_1(%arg0: i32, %arg1: i32) -> (i32, i32) {
    %c0_i32 = arith.constant 0 : i32
    %c0_i32_0 = arith.constant 0 : i32
    return %c0_i32, %arg1 : i32, i32
  }
  func.func @transform_2(%arg0: i32, %arg1: i32) -> (i32, i32) {
    %c0_i32 = arith.constant 0 : i32
    %c0_i32_0 = arith.constant 0 : i32
    return %c0_i32, %arg1 : i32, i32
  }
  func.func @transform_3(%arg0: i32, %arg1: i32) -> (i32, i32) {
    %c0_i32 = arith.constant 0 : i32
    return %arg0, %arg1 : i32, i32
  }
}

</mosaic_0001>

<llo_original>
// kernel: bin_conv2d.1
$region0: #{bin_conv2d.1}
  #allocation0 [shape = 'u32[]', space=smem, size = 0x4, offset = 0x4, fixed_abs, tag = 'smem constant byte address 0x4 - core index']
  #allocation1 [shape = 'u32[144,128]{1,0:T(1,128)}', space=vmem, size = 0x12000, scoped, tag = 'internal scratch']
  %s0 = inlined_call_operand.vmem [shape: bf16[512,36], index: 0, kind: input, shape index: {}]
  %s1 = inlined_call_operand.vmem [shape: bf16[36,8], index: 1, kind: input, shape index: {}]
  %s2 = inlined_call_operand.vmem [shape: bf16[36,8], index: 2, kind: input, shape index: {}]
  %s3 = inlined_call_operand.vmem [shape: f32[512,8], index: 3, kind: output, shape index: {}]
  %s4 = sld [smem:[#allocation0]]
  $region45: #{bin_conv2d.1} parent=0
    _
  %s6 = ssub.s32 1, %s4
  %s7 = scalar_select 0, %s6, %s4
  loop: start=0, step=1, limit=4
  $region2: #{bin_conv2d.1} parent=0 // loop_pre_header
    _
  $region3: #{bin_conv2d.1} parent=0 // loop_header
    %s9 = sphi 0, %s13
    %p10 = scmp.ge.s32.totalorder %s9, 4
    %s16 = sphi 0, %s28
    %s17 = sphi 0, %s24
    %s18 = sphi 0, %s16
    %s19 = sphi 0, %s17
    %s20 = sphi 0, %s18
    %s21 = sphi 0, %s19
    %s31 = sphi 0, %s33
    %s34 = sphi 0, %s31
    %s35 = sphi 0, %s34
    %s51 = sphi 0, %s35
    %s57 = sphi 0, %s59
    %s60 = sphi 0, %s57
    %s61 = sphi 0, %s60
    %s77 = sphi 0, %s61
    %s83 = sphi 0, %s85
    %s86 = sphi 0, %s83
    %s87 = sphi 0, %s86
    %s103 = sphi 0, %s87
    %s111 = sphi 0, %s113
    %s114 = sphi 0, %s111
    %s115 = sphi 0, %s114
    %s131 = sphi 0, %s115
  $region4: #{bin_conv2d.1} parent=0 // loop_header_branch
    %12 = sbr.rel (%p10) target = $region8
  $region5: #{bin_conv2d.1} parent=0 // loop_body
    %s14 = ssub.s32 %s9, 1
    %s15 = ssub.s32 %s9, 2
    %s22 = sadd.s32 1, %s17
    %p23 = scmp.ge.s32.totalorder %s22, 1
    %s24 = scalar_select %p23, 0, %s22
    %s25 = sadd.s32 1, %s16
    %s26 = scalar_select %p23, %s25, %s16
    %p27 = scmp.ge.s32.totalorder %s26, 2
    %s28 = scalar_select %p27, 0, %s26
    %s29 = ssub.s32 %s16, %s28
    %p30 = scmp.eq.s32.totalorder %s29, 0
    %s32 = sadd.s32 %s31, 1
    %s33 = scalar_select %p30, %s31, %s32
    %p36 = pneg %p30
    %p37 = scmp.eq.s32.totalorder %s9, 1
    %p38 = por %p36, %p37
    %p39 = scmp.ne.s32.totalorder %s31, %s34
    %p40 = scmp.eq.s32.totalorder %s9, 0
    %p41 = por %p39, %p40
    %p42 = scmp.ne.s32.totalorder %s31, %s34
    %p43 = scmp.eq.s32.totalorder %s14, 1
    %p44 = por %p42, %p43
    %p45 = scmp.ne.s32.totalorder %s34, %s35
    %p46 = scmp.eq.s32.totalorder %s14, 0
    %p47 = por %p45, %p46
    %p48 = scmp.ne.s32.totalorder %s34, %s35
    %p49 = scmp.eq.s32.totalorder %s15, 1
    %p50 = por %p48, %p49
    %p52 = scmp.ne.s32.totalorder %s35, %s51
    %p53 = scmp.eq.s32.totalorder %s15, 0
    %p54 = por %p52, %p53
    %s55 = ssub.s32 %s17, %s24
    %p56 = scmp.eq.s32.totalorder %s55, 0
    %s58 = sadd.s32 %s57, 1
    %s59 = scalar_select %p56, %s57, %s58
    %p62 = pneg %p56
    %p63 = scmp.eq.s32.totalorder %s9, 1
    %p64 = por %p62, %p63
    %p65 = scmp.ne.s32.totalorder %s57, %s60
    %p66 = scmp.eq.s32.totalorder %s9, 0
    %p67 = por %p65, %p66
    %p68 = scmp.ne.s32.totalorder %s57, %s60
    %p69 = scmp.eq.s32.totalorder %s14, 1
    %p70 = por %p68, %p69
    %p71 = scmp.ne.s32.totalorder %s60, %s61
    %p72 = scmp.eq.s32.totalorder %s14, 0
    %p73 = por %p71, %p72
    %p74 = scmp.ne.s32.totalorder %s60, %s61
    %p75 = scmp.eq.s32.totalorder %s15, 1
    %p76 = por %p74, %p75
    %p78 = scmp.ne.s32.totalorder %s61, %s77
    %p79 = scmp.eq.s32.totalorder %s15, 0
    %p80 = por %p78, %p79
    %s81 = ssub.s32 %s17, %s24
    %p82 = scmp.eq.s32.totalorder %s81, 0
    %s84 = sadd.s32 %s83, 1
    %s85 = scalar_select %p82, %s83, %s84
    %p88 = pneg %p82
    %p89 = scmp.eq.s32.totalorder %s9, 1
    %p90 = por %p88, %p89
    %p91 = scmp.ne.s32.totalorder %s83, %s86
    %p92 = scmp.eq.s32.totalorder %s9, 0
    %p93 = por %p91, %p92
    %p94 = scmp.ne.s32.totalorder %s83, %s86
    %p95 = scmp.eq.s32.totalorder %s14, 1
    %p96 = por %p94, %p95
    %p97 = scmp.ne.s32.totalorder %s86, %s87
    %p98 = scmp.eq.s32.totalorder %s14, 0
    %p99 = por %p97, %p98
    %p100 = scmp.ne.s32.totalorder %s86, %s87
    %p101 = scmp.eq.s32.totalorder %s15, 1
    %p102 = por %p100, %p101
    %p104 = scmp.ne.s32.totalorder %s87, %s103
    %p105 = scmp.eq.s32.totalorder %s15, 0
    %p106 = por %p104, %p105
    %s107 = ssub.s32 %s16, %s28
    %s108 = ssub.s32 %s17, %s24
    %s109 = sor.u32 %s107, %s108
    %p110 = scmp.eq.s32.totalorder %s109, 0
    %s112 = sadd.s32 %s111, 1
    %s113 = scalar_select %p110, %s111, %s112
    %p116 = pneg %p110
    %p117 = scmp.eq.s32.totalorder %s9, 1
    %p118 = por %p116, %p117
    %p119 = scmp.ne.s32.totalorder %s111, %s114
    %p120 = scmp.eq.s32.totalorder %s9, 0
    %p121 = por %p119, %p120
    %p122 = scmp.ne.s32.totalorder %s111, %s114
    %p123 = scmp.eq.s32.totalorder %s14, 1
    %p124 = por %p122, %p123
    %p125 = scmp.ne.s32.totalorder %s114, %s115
    %p126 = scmp.eq.s32.totalorder %s14, 0
    %p127 = por %p125, %p126
    %p128 = scmp.ne.s32.totalorder %s114, %s115
    %p129 = scmp.eq.s32.totalorder %s15, 1
    %p130 = por %p128, %p129
    %p132 = scmp.ne.s32.totalorder %s115, %s131
    %p133 = scmp.eq.s32.totalorder %s15, 0
    %p134 = por %p132, %p133
    %p135 = scmp.le.s32.totalorder 1, %s9
    %p136 = scmp.lt.s32.totalorder %s9, 3
    %p137 = pnand %p135, %p136
    %p138 = pneg %p137
    // Predicated region
    $region9: #{bin_conv2d.1} parent=5 // pred_check
      _
    $region10: #{bin_conv2d.1} parent=5 // pred_check_branch
      %140 = sbr.rel (%p137) target = $region12
    $region11: #{bin_conv2d.1} parent=5 // pred_region
      %s141 = ssub.s32 %s9, 1
      // Predicated region
      $region13: #{bin_conv2d.1} parent=11 // pred_check
        %p142 = pneg %p73
      $region14: #{bin_conv2d.1} parent=11 // pred_check_branch
        %144 = sbr.rel (%p142) target = $region16
      $region15: #{bin_conv2d.1} parent=11 // pred_region
        %p145 = scmp.lt.s32.totalorder %s19, 0
        %s146 = scalar_select %p145, %s19, 0
        %s147 = smul.addr %s146, 4
        %s148 = scalar_lea.vmem %s1, %s147
      $region16: #{bin_conv2d.1} parent=11 // pred_fallthru
        _
      // Predicated region
      $region17: #{bin_conv2d.1} parent=11 // pred_check
        %p149 = pneg %p99
      $region18: #{bin_conv2d.1} parent=11 // pred_check_branch
        %151 = sbr.rel (%p149) target = $region20
      $region19: #{bin_conv2d.1} parent=11 // pred_region
        %p152 = scmp.lt.s32.totalorder %s19, 0
        %s153 = scalar_select %p152, %s19, 0
        %s154 = smul.addr %s153, 4
        %s155 = scalar_lea.vmem %s2, %s154
      $region20: #{bin_conv2d.1} parent=11 // pred_fallthru
        _
    $region12: #{bin_conv2d.1} parent=5 // pred_fallthru
      _
    %p156 = scmp.lt.s32.totalorder %s9, 2
    // Predicated region
    $region21: #{bin_conv2d.1} parent=5 // pred_check
      %p157 = pneg %p156
    $region22: #{bin_conv2d.1} parent=5 // pred_check_branch
      %159 = sbr.rel (%p157) target = $region24
    $region23: #{bin_conv2d.1} parent=5 // pred_region
      // Predicated region
      $region25: #{bin_conv2d.1} parent=23 // pred_check
        %p160 = pneg %p41
      $region26: #{bin_conv2d.1} parent=23 // pred_check_branch
        %162 = sbr.rel (%p160) target = $region28
      $region27: #{bin_conv2d.1} parent=23 // pred_region
        %s163 = smul.u32 32, %s16
        %p164 = scmp.lt.s32.totalorder %s163, 63
        %s165 = scalar_select %p164, %s163, 63
        %s166 = smul.addr %s165, 4
        %s167 = scalar_lea.vmem %s0, %s166
        %s168 = smul.u32 32, %s16
      $region28: #{bin_conv2d.1} parent=23 // pred_fallthru
        _
    $region24: #{bin_conv2d.1} parent=5 // pred_fallthru
      _
    %p169 = scmp.le.s32.totalorder 1, %s9
    %p170 = scmp.lt.s32.totalorder %s9, 3
    %p171 = pnand %p169, %p170
    %p172 = pneg %p171
    // Predicated region
    $region29: #{bin_conv2d.1} parent=5 // pred_check
      _
    $region30: #{bin_conv2d.1} parent=5 // pred_check_branch
      %174 = sbr.rel (%p171) target = $region32
    $region31: #{bin_conv2d.1} parent=5 // pred_region
      %s175 = ssub.s32 %s9, 1
      %s176 = smul.u32 32, %s18
      %p177 = scmp.lt.s32.totalorder %s176, 63
      %s178 = scalar_select %p177, %s176, 63
      %s179 = smul.addr %s178, 4
      %s180 = scalar_lea.vmem %s0, %s179
      %p181 = pneg %p47
      %p182 = pneg %p44
      %p183 = scmp.lt.s32.totalorder %s19, 0
      %s184 = scalar_select %p183, %s19, 0
      %s185 = smul.addr %s184, 4
      %s186 = scalar_lea.vmem %s1, %s185
      %p187 = pneg %p73
      %p188 = pneg %p70
      %p189 = scmp.lt.s32.totalorder %s19, 0
      %s190 = scalar_select %p189, %s19, 0
      %s191 = smul.addr %s190, 4
      %s192 = scalar_lea.vmem %s2, %s191
      %p193 = pneg %p99
      %p194 = pneg %p96
      %p195 = pneg %p127
      %p196 = pneg %p124
      %s197 = smul.u32 32, %s18
      %p198 = scmp.lt.s32.totalorder %s197, 63
      %s199 = scalar_select %p198, %s197, 63
      %p200 = scmp.lt.s32.totalorder %s19, 0
      %s201 = scalar_select %p200, %s19, 0
      %s202 = sadd.s32 %s201, %s199
      %s203 = smul.addr %s202, 8
      %s204 = scalar_lea.vmem %s3, %s203
      %s205 = smul.u32 32, %s18
      %p206 = scmp.lt.s32.totalorder %s205, 63
      %s207 = scalar_select %p206, %s205, 63
      %s208 = smul.addr %s207, 4
      %s209 = scalar_lea.vmem %s0, %s208
      %s210 = smul.u32 32, %s18
      %p211 = scmp.lt.s32.totalorder %s19, 0
      %s212 = scalar_select %p211, %s19, 0
      %s213 = smul.addr %s212, 4
      %s214 = scalar_lea.vmem %s1, %s213
      %p215 = scmp.lt.s32.totalorder %s19, 0
      %s216 = scalar_select %p215, %s19, 0
      %s217 = smul.addr %s216, 4
      %s218 = scalar_lea.vmem %s2, %s217
      %s219 = smul.u32 32, %s18
      %p220 = scmp.lt.s32.totalorder %s219, 63
      %s221 = scalar_select %p220, %s219, 63
      %p222 = scmp.lt.s32.totalorder %s19, 0
      %s223 = scalar_select %p222, %s19, 0
      %s224 = sadd.s32 %s223, %s221
      %s225 = smul.addr %s224, 8
      %s226 = scalar_lea.vmem %s3, %s225
      %s227 = smul.u32 32, %s18
      %v229 = vld [vmem:[%s209] sm:$0xf]
      %v230 = vld [vmem:[%s209 + $0x4] sm:$0xf]
      %v231 = vld [vmem:[%s209 + $0x8] sm:$0xf]
      %v232 = vld [vmem:[%s209 + $0xc] sm:$0xf]
      %v233 = vld [vmem:[%s209 + $0x10] sm:$0xf]
      %v234 = vld [vmem:[%s209 + $0x14] sm:$0xf]
      %v235 = vld [vmem:[%s209 + $0x18] sm:$0xf]
      %v236 = vld [vmem:[%s209 + $0x1c] sm:$0xf]
      %v237 = vld [vmem:[%s209 + $0x20] sm:$0xf]
      %v238 = vld [vmem:[%s209 + $0x24] sm:$0xf]
      %v239 = vld [vmem:[%s209 + $0x28] sm:$0xf]
      %v240 = vld [vmem:[%s209 + $0x2c] sm:$0xf]
      %v241 = vld [vmem:[%s209 + $0x30] sm:$0xf]
      %v242 = vld [vmem:[%s209 + $0x34] sm:$0xf]
      %v243 = vld [vmem:[%s209 + $0x38] sm:$0xf]
      %v244 = vld [vmem:[%s209 + $0x3c] sm:$0xf]
      %v245 = vld [vmem:[%s209 + $0x40] sm:$0xf]
      %v246 = vld [vmem:[%s209 + $0x44] sm:$0xf]
      %v247 = vld [vmem:[%s209 + $0x48] sm:$0xf]
      %v248 = vld [vmem:[%s209 + $0x4c] sm:$0xf]
      %v249 = vld [vmem:[%s209 + $0x50] sm:$0xf]
      %v250 = vld [vmem:[%s209 + $0x54] sm:$0xf]
      %v251 = vld [vmem:[%s209 + $0x58] sm:$0xf]
      %v252 = vld [vmem:[%s209 + $0x5c] sm:$0xf]
      %v253 = vld [vmem:[%s209 + $0x60] sm:$0xf]
      %v254 = vld [vmem:[%s209 + $0x64] sm:$0xf]
      %v255 = vld [vmem:[%s209 + $0x68] sm:$0xf]
      %v256 = vld [vmem:[%s209 + $0x6c] sm:$0xf]
      %v257 = vld [vmem:[%s209 + $0x70] sm:$0xf]
      %v258 = vld [vmem:[%s209 + $0x74] sm:$0xf]
      %v259 = vld [vmem:[%s209 + $0x78] sm:$0xf]
      %v260 = vld [vmem:[%s209 + $0x7c] sm:$0xf]
      %v261 = vld [vmem:[%s214] sm:$0xf]
      %v262 = vld [vmem:[%s214 + $0x4] sm:$0xf]
      %v263 = vld [vmem:[%s214 + $0x8] sm:$0xf]
      %v264 = vld [vmem:[%s214 + $0xc] sm:$0xf]
      %v265 = vld [vmem:[%s214 + $0x10] sm:$0x3]
      %v266 = vld [vmem:[%s218] sm:$0xf]
      %v267 = vld [vmem:[%s218 + $0x4] sm:$0xf]
      %v268 = vld [vmem:[%s218 + $0x8] sm:$0xf]
      %v269 = vld [vmem:[%s218 + $0xc] sm:$0xf]
      %v270 = vld [vmem:[%s218 + $0x10] sm:$0x3]
      %v303 = vunpack.c.l.b16 %v229
      %v304 = vunpack.c.l.b16 %v230
      %v305 = vunpack.c.l.b16 %v231
      %v306 = vunpack.c.l.b16 %v232
      %v307 = vunpack.c.l.b16 %v233
      %v308 = vunpack.c.l.b16 %v234
      %v309 = vunpack.c.l.b16 %v235
      %v310 = vunpack.c.l.b16 %v236
      %v311 = vunpack.c.l.b16 %v237
      %v312 = vunpack.c.l.b16 %v238
      %v313 = vunpack.c.l.b16 %v239
      %v314 = vunpack.c.l.b16 %v240
      %v315 = vunpack.c.l.b16 %v241
      %v316 = vunpack.c.l.b16 %v242
      %v317 = vunpack.c.l.b16 %v243
      %v318 = vunpack.c.l.b16 %v244
      %v319 = vunpack.c.l.b16 %v245
      %v320 = vunpack.c.l.b16 %v246
      %v321 = vunpack.c.l.b16 %v247
      %v322 = vunpack.c.l.b16 %v248
      %v323 = vunpack.c.l.b16 %v249
      %v324 = vunpack.c.l.b16 %v250
      %v325 = vunpack.c.l.b16 %v251
      %v326 = vunpack.c.l.b16 %v252
      %v327 = vunpack.c.l.b16 %v253
      %v328 = vunpack.c.l.b16 %v254
      %v329 = vunpack.c.l.b16 %v255
      %v330 = vunpack.c.l.b16 %v256
      %v331 = vunpack.c.l.b16 %v257
      %v332 = vunpack.c.l.b16 %v258
      %v333 = vunpack.c.l.b16 %v259
      %v334 = vunpack.c.l.b16 %v260
      %v335 = vpack.c.b16 %v304, %v303
      %v336 = vpack.c.b16 %v306, %v305
      %v337 = vpack.c.b16 %v308, %v307
      %v338 = vpack.c.b16 %v310, %v309
      %v339 = vpack.c.b16 %v312, %v311
      %v340 = vpack.c.b16 %v314, %v313
      %v341 = vpack.c.b16 %v316, %v315
      %v342 = vpack.c.b16 %v318, %v317
      %v343 = vpack.c.b16 %v320, %v319
      %v344 = vpack.c.b16 %v322, %v321
      %v345 = vpack.c.b16 %v324, %v323
      %v346 = vpack.c.b16 %v326, %v325
      %v347 = vpack.c.b16 %v328, %v327
      %v348 = vpack.c.b16 %v330, %v329
      %v349 = vpack.c.b16 %v332, %v331
      %v350 = vpack.c.b16 %v334, %v333
      %v356 = vunpack.c.l.b16 %v266
      %v357 = vunpack.c.l.b16 %v267
      %v358 = vunpack.c.l.b16 %v268
      %v359 = vunpack.c.l.b16 %v269
      %v360 = vunpack.c.l.b16 %v270
      %v361 = vpack.c.b16 %v357, %v356
      %v362 = vpack.c.b16 %v359, %v358
      %v363 = vpack.c.b16 %v360, %v360
      %vm366 = vcmask 293888
      %v368 = vsel %vm366, %v335, 0
      %v371 = vsel %vm366, %v336, 0
      %v374 = vsel %vm366, %v337, 0
      %v377 = vsel %vm366, %v338, 0
      %v380 = vsel %vm366, %v339, 0
      %v383 = vsel %vm366, %v340, 0
      %v386 = vsel %vm366, %v341, 0
      %v389 = vsel %vm366, %v342, 0
      %v392 = vsel %vm366, %v343, 0
      %v395 = vsel %vm366, %v344, 0
      %v398 = vsel %vm366, %v345, 0
      %v401 = vsel %vm366, %v346, 0
      %v404 = vsel %vm366, %v347, 0
      %v407 = vsel %vm366, %v348, 0
      %v410 = vsel %vm366, %v349, 0
      %v413 = vsel %vm366, %v350, 0
      %vm415 = vcmask 1041408
      %v417 = vsel %vm415, %v363, 0
      %419 = vmatprep.subr.bf16.mxu0 0
      %420 = vmatpush1.bf16.msra.mxu0 %v361
      %421 = vmatprep.subr.bf16.mxu0 0
      %422 = vmatpush1.bf16.msra.mxu0 %v362
      %423 = vmatprep.subr.bf16.mxu0 0
      %424 = vmatpush1.bf16.msra.mxu0 %v417
      %425 = vmatprep.subr.bf16.mxu0 0
      %426 = vmatpush1.bf16.msra.mxu0 0
      %427 = vmatprep.subr.bf16.mxu0 0
      %428 = vmatpush1.bf16.msra.mxu0 0
      %429 = vmatprep.subr.bf16.mxu0 0
      %430 = vmatpush1.bf16.msra.mxu0 0
      %431 = vmatprep.subr.bf16.mxu0 0
      %432 = vmatpush1.bf16.msra.mxu0 0
      %433 = vmatprep.subr.bf16.mxu0 0
      %434 = vmatpush1.bf16.msra.mxu0 0
      %435 = vmatprep.subr.bf16.mxu0 0
      %436 = vmatpush1.bf16.msra.mxu0 0
      %437 = vmatprep.subr.bf16.mxu0 0
      %438 = vmatpush1.bf16.msra.mxu0 0
      %439 = vmatprep.subr.bf16.mxu0 0
      %440 = vmatpush1.bf16.msra.mxu0 0
      %441 = vmatprep.subr.bf16.mxu0 0
      %442 = vmatpush1.bf16.msra.mxu0 0
      %443 = vmatprep.subr.bf16.mxu0 0
      %444 = vmatpush1.bf16.msra.mxu0 0
      %445 = vmatprep.subr.bf16.mxu0 0
      %446 = vmatpush1.bf16.msra.mxu0 0
      %447 = vmatprep.subr.bf16.mxu0 0
      %448 = vmatpush1.bf16.msra.mxu0 0
      %449 = vmatprep.subr.bf16.mxu0 0
      %450 = vmatpush1.bf16.msra.mxu0 0
      %451 = vmatprep.mubr.bf16.mxu0 0
      %452 = vmatmul.mubr.bf16.gmra.mrb[0].mxu0 %v368
      %v453 = vpop.f32.mrb[0].mxu0
      %v454 = vadd.f32 0.0, %v453
      %v455 = vpop.f32.mrb[0].mxu0
      %v456 = vpop.f32.mrb[0].mxu0
      %v457 = vadd.f32 0.0, %v456
      %v458 = vpop.f32.mrb[0].mxu0
      %459 = vmatprep.mubr.bf16.mxu0 0
      %460 = vmatmul.mubr.bf16.gmra.mrb[0].mxu0 %v371
      %v461 = vpop.f32.mrb[0].mxu0
      %v462 = vadd.f32 0.0, %v461
      %v463 = vpop.f32.mrb[0].mxu0
      %v464 = vpop.f32.mrb[0].mxu0
      %v465 = vadd.f32 0.0, %v464
      %v466 = vpop.f32.mrb[0].mxu0
      %467 = vmatprep.mubr.bf16.mxu0 0
      %468 = vmatmul.mubr.bf16.gmra.mrb[0].mxu0 %v374
      %v469 = vpop.f32.mrb[0].mxu0
      %v470 = vadd.f32 0.0, %v469
      %v471 = vpop.f32.mrb[0].mxu0
      %v472 = vpop.f32.mrb[0].mxu0
      %v473 = vadd.f32 0.0, %v472
      %v474 = vpop.f32.mrb[0].mxu0
      %475 = vmatprep.mubr.bf16.mxu0 0
      %476 = vmatmul.mubr.bf16.gmra.mrb[0].mxu0 %v377
      %v477 = vpop.f32.mrb[0].mxu0
      %v478 = vadd.f32 0.0, %v477
      %v479 = vpop.f32.mrb[0].mxu0
      %v480 = vpop.f32.mrb[0].mxu0
      %v481 = vadd.f32 0.0, %v480
      %v482 = vpop.f32.mrb[0].mxu0
      %483 = vmatprep.mubr.bf16.mxu0 0
      %484 = vmatmul.mubr.bf16.gmra.mrb[0].mxu0 %v380
      %v485 = vpop.f32.mrb[0].mxu0
      %v486 = vadd.f32 0.0, %v485
      %v487 = vpop.f32.mrb[0].mxu0
      %v488 = vpop.f32.mrb[0].mxu0
      %v489 = vadd.f32 0.0, %v488
      %v490 = vpop.f32.mrb[0].mxu0
      %491 = vmatprep.mubr.bf16.mxu0 0
      %492 = vmatmul.mubr.bf16.gmra.mrb[0].mxu0 %v383
      %v493 = vpop.f32.mrb[0].mxu0
      %v494 = vadd.f32 0.0, %v493
      %v495 = vpop.f32.mrb[0].mxu0
      %v496 = vpop.f32.mrb[0].mxu0
      %v497 = vadd.f32 0.0, %v496
      %v498 = vpop.f32.mrb[0].mxu0
      %499 = vmatprep.mubr.bf16.mxu0 0
      %500 = vmatmul.mubr.bf16.gmra.mrb[0].mxu0 %v386
      %v501 = vpop.f32.mrb[0].mxu0
      %v502 = vadd.f32 0.0, %v501
      %v503 = vpop.f32.mrb[0].mxu0
      %v504 = vpop.f32.mrb[0].mxu0
      %v505 = vadd.f32 0.0, %v504
      %v506 = vpop.f32.mrb[0].mxu0
      %507 = vmatprep.mubr.bf16.mxu0 0
      %508 = vmatmul.mubr.bf16.gmra.mrb[0].mxu0 %v389
      %v509 = vpop.f32.mrb[0].mxu0
      %v510 = vadd.f32 0.0, %v509
      %v511 = vpop.f32.mrb[0].mxu0
      %v512 = vpop.f32.mrb[0].mxu0
      %v513 = vadd.f32 0.0, %v512
      %v514 = vpop.f32.mrb[0].mxu0
      %515 = vmatprep.mubr.bf16.mxu0 0
      %516 = vmatmul.mubr.bf16.gmra.mrb[0].mxu0 %v392
      %v517 = vpop.f32.mrb[0].mxu0
      %v518 = vadd.f32 0.0, %v517
      %v519 = vpop.f32.mrb[0].mxu0
      %v520 = vpop.f32.mrb[0].mxu0
      %v521 = vadd.f32 0.0, %v520
      %v522 = vpop.f32.mrb[0].mxu0
      %523 = vmatprep.mubr.bf16.mxu0 0
      %524 = vmatmul.mubr.bf16.gmra.mrb[0].mxu0 %v395
      %v525 = vpop.f32.mrb[0].mxu0
      %v526 = vadd.f32 0.0, %v525
      %v527 = vpop.f32.mrb[0].mxu0
      %v528 = vpop.f32.mrb[0].mxu0
      %v529 = vadd.f32 0.0, %v528
      %v530 = vpop.f32.mrb[0].mxu0
      %531 = vmatprep.mubr.bf16.mxu0 0
      %532 = vmatmul.mubr.bf16.gmra.mrb[0].mxu0 %v398
      %v533 = vpop.f32.mrb[0].mxu0
      %v534 = vadd.f32 0.0, %v533
      %v535 = vpop.f32.mrb[0].mxu0
      %v536 = vpop.f32.mrb[0].mxu0
      %v537 = vadd.f32 0.0, %v536
      %v538 = vpop.f32.mrb[0].mxu0
      %539 = vmatprep.mubr.bf16.mxu0 0
      %540 = vmatmul.mubr.bf16.gmra.mrb[0].mxu0 %v401
      %v541 = vpop.f32.mrb[0].mxu0
      %v542 = vadd.f32 0.0, %v541
      %v543 = vpop.f32.mrb[0].mxu0
      %v544 = vpop.f32.mrb[0].mxu0
      %v545 = vadd.f32 0.0, %v544
      %v546 = vpop.f32.mrb[0].mxu0
      %547 = vmatprep.mubr.bf16.mxu0 0
      %548 = vmatmul.mubr.bf16.gmra.mrb[0].mxu0 %v404
      %v549 = vpop.f32.mrb[0].mxu0
      %v550 = vadd.f32 0.0, %v549
      %v551 = vpop.f32.mrb[0].mxu0
      %v552 = vpop.f32.mrb[0].mxu0
      %v553 = vadd.f32 0.0, %v552
      %v554 = vpop.f32.mrb[0].mxu0
      %555 = vmatprep.mubr.bf16.mxu0 0
      %556 = vmatmul.mubr.bf16.gmra.mrb[0].mxu0 %v407
      %v557 = vpop.f32.mrb[0].mxu0
      %v558 = vadd.f32 0.0, %v557
      %v559 = vpop.f32.mrb[0].mxu0
      %v560 = vpop.f32.mrb[0].mxu0
      %v561 = vadd.f32 0.0, %v560
      %v562 = vpop.f32.mrb[0].mxu0
      %563 = vmatprep.mubr.bf16.mxu0 0
      %564 = vmatmul.mubr.bf16.gmra.mrb[0].mxu0 %v410
      %v565 = vpop.f32.mrb[0].mxu0
      %v566 = vadd.f32 0.0, %v565
      %v567 = vpop.f32.mrb[0].mxu0
      %v568 = vpop.f32.mrb[0].mxu0
      %v569 = vadd.f32 0.0, %v568
      %v570 = vpop.f32.mrb[0].mxu0
      %571 = vmatprep.mubr.bf16.mxu0 0
      %572 = vmatmul.mubr.bf16.gmra.mrb[0].mxu0 %v413
      %v573 = vpop.f32.mrb[0].mxu0
      %v574 = vadd.f32 0.0, %v573
      %v575 = vpop.f32.mrb[0].mxu0
      %v576 = vpop.f32.mrb[0].mxu0
      %v577 = vadd.f32 0.0, %v576
      %v578 = vpop.f32.mrb[0].mxu0
      %579 = vdwg.mxu0
      %v585 = vunpack.c.l.b16 %v261
      %v586 = vunpack.c.l.b16 %v262
      %v587 = vunpack.c.l.b16 %v263
      %v588 = vunpack.c.l.b16 %v264
      %v589 = vunpack.c.l.b16 %v265
      %v590 = vpack.c.b16 %v586, %v585
      %v591 = vpack.c.b16 %v588, %v587
      %v592 = vpack.c.b16 %v589, %v589
      %v596 = vsel %vm415, %v592, 0
      %598 = vmatprep.subr.bf16.mxu0 0
      %599 = vmatpush1.bf16.msra.mxu0 %v590
      %600 = vmatprep.subr.bf16.mxu0 0
      %601 = vmatpush1.bf16.msra.mxu0 %v591
      %602 = vmatprep.subr.bf16.mxu0 0
      %603 = vmatpush1.bf16.msra.mxu0 %v596
      %604 = vmatprep.subr.bf16.mxu0 0
      %605 = vmatpush1.bf16.msra.mxu0 0
      %606 = vmatprep.subr.bf16.mxu0 0
      %607 = vmatpush1.bf16.msra.mxu0 0
      %608 = vmatprep.subr.bf16.mxu0 0
      %609 = vmatpush1.bf16.msra.mxu0 0
      %610 = vmatprep.subr.bf16.mxu0 0
      %611 = vmatpush1.bf16.msra.mxu0 0
      %612 = vmatprep.subr.bf16.mxu0 0
      %613 = vmatpush1.bf16.msra.mxu0 0
      %614 = vmatprep.subr.bf16.mxu0 0
      %615 = vmatpush1.bf16.msra.mxu0 0
      %616 = vmatprep.subr.bf16.mxu0 0
      %617 = vmatpush1.bf16.msra.mxu0 0
      %618 = vmatprep.subr.bf16.mxu0 0
      %619 = vmatpush1.bf16.msra.mxu0 0
      %620 = vmatprep.subr.bf16.mxu0 0
      %621 = vmatpush1.bf16.msra.mxu0 0
      %622 = vmatprep.subr.bf16.mxu0 0
      %623 = vmatpush1.bf16.msra.mxu0 0
      %624 = vmatprep.subr.bf16.mxu0 0
      %625 = vmatpush1.bf16.msra.mxu0 0
      %626 = vmatprep.subr.bf16.mxu0 0
      %627 = vmatpush1.bf16.msra.mxu0 0
      %628 = vmatprep.subr.bf16.mxu0 0
      %629 = vmatpush1.bf16.msra.mxu0 0
      %630 = vmatprep.mubr.bf16.mxu0 0
      %631 = vmatmul.mubr.bf16.gmra.mrb[0].mxu0 %v368
      %v632 = vpop.f32.mrb[0].mxu0
      %v633 = vadd.f32 %v454, %v632
      %v634 = vpop.f32.mrb[0].mxu0
      %v635 = vpop.f32.mrb[0].mxu0
      %v636 = vadd.f32 %v457, %v635
      %v637 = vpop.f32.mrb[0].mxu0
      %638 = vmatprep.mubr.bf16.mxu0 0
      %639 = vmatmul.mubr.bf16.gmra.mrb[0].mxu0 %v371
      %v640 = vpop.f32.mrb[0].mxu0
      %v641 = vadd.f32 %v462, %v640
      %v642 = vpop.f32.mrb[0].mxu0
      %v643 = vpop.f32.mrb[0].mxu0
      %v644 = vadd.f32 %v465, %v643
      %v645 = vpop.f32.mrb[0].mxu0
      %646 = vmatprep.mubr.bf16.mxu0 0
      %647 = vmatmul.mubr.bf16.gmra.mrb[0].mxu0 %v374
      %v648 = vpop.f32.mrb[0].mxu0
      %v649 = vadd.f32 %v470, %v648
      %v650 = vpop.f32.mrb[0].mxu0
      %v651 = vpop.f32.mrb[0].mxu0
      %v652 = vadd.f32 %v473, %v651
      %v653 = vpop.f32.mrb[0].mxu0
      %654 = vmatprep.mubr.bf16.mxu0 0
      %655 = vmatmul.mubr.bf16.gmra.mrb[0].mxu0 %v377
      %v656 = vpop.f32.mrb[0].mxu0
      %v657 = vadd.f32 %v478, %v656
      %v658 = vpop.f32.mrb[0].mxu0
      %v659 = vpop.f32.mrb[0].mxu0
      %v660 = vadd.f32 %v481, %v659
      %v661 = vpop.f32.mrb[0].mxu0
      %662 = vmatprep.mubr.bf16.mxu0 0
      %663 = vmatmul.mubr.bf16.gmra.mrb[0].mxu0 %v380
      %v664 = vpop.f32.mrb[0].mxu0
      %v665 = vadd.f32 %v486, %v664
      %v666 = vpop.f32.mrb[0].mxu0
      %v667 = vpop.f32.mrb[0].mxu0
      %v668 = vadd.f32 %v489, %v667
      %v669 = vpop.f32.mrb[0].mxu0
      %670 = vmatprep.mubr.bf16.mxu0 0
      %671 = vmatmul.mubr.bf16.gmra.mrb[0].mxu0 %v383
      %v672 = vpop.f32.mrb[0].mxu0
      %v673 = vadd.f32 %v494, %v672
      %v674 = vpop.f32.mrb[0].mxu0
      %v675 = vpop.f32.mrb[0].mxu0
      %v676 = vadd.f32 %v497, %v675
      %v677 = vpop.f32.mrb[0].mxu0
      %678 = vmatprep.mubr.bf16.mxu0 0
      %679 = vmatmul.mubr.bf16.gmra.mrb[0].mxu0 %v386
      %v680 = vpop.f32.mrb[0].mxu0
      %v681 = vadd.f32 %v502, %v680
      %v682 = vpop.f32.mrb[0].mxu0
      %v683 = vpop.f32.mrb[0].mxu0
      %v684 = vadd.f32 %v505, %v683
      %v685 = vpop.f32.mrb[0].mxu0
      %686 = vmatprep.mubr.bf16.mxu0 0
      %687 = vmatmul.mubr.bf16.gmra.mrb[0].mxu0 %v389
      %v688 = vpop.f32.mrb[0].mxu0
      %v689 = vadd.f32 %v510, %v688
      %v690 = vpop.f32.mrb[0].mxu0
      %v691 = vpop.f32.mrb[0].mxu0
      %v692 = vadd.f32 %v513, %v691
      %v693 = vpop.f32.mrb[0].mxu0
      %694 = vmatprep.mubr.bf16.mxu0 0
      %695 = vmatmul.mubr.bf16.gmra.mrb[0].mxu0 %v392
      %v696 = vpop.f32.mrb[0].mxu0
      %v697 = vadd.f32 %v518, %v696
      %v698 = vpop.f32.mrb[0].mxu0
      %v699 = vpop.f32.mrb[0].mxu0
      %v700 = vadd.f32 %v521, %v699
      %v701 = vpop.f32.mrb[0].mxu0
      %702 = vmatprep.mubr.bf16.mxu0 0
      %703 = vmatmul.mubr.bf16.gmra.mrb[0].mxu0 %v395
      %v704 = vpop.f32.mrb[0].mxu0
      %v705 = vadd.f32 %v526, %v704
      %v706 = vpop.f32.mrb[0].mxu0
      %v707 = vpop.f32.mrb[0].mxu0
      %v708 = vadd.f32 %v529, %v707
      %v709 = vpop.f32.mrb[0].mxu0
      %710 = vmatprep.mubr.bf16.mxu0 0
      %711 = vmatmul.mubr.bf16.gmra.mrb[0].mxu0 %v398
      %v712 = vpop.f32.mrb[0].mxu0
      %v713 = vadd.f32 %v534, %v712
      %v714 = vpop.f32.mrb[0].mxu0
      %v715 = vpop.f32.mrb[0].mxu0
      %v716 = vadd.f32 %v537, %v715
      %v717 = vpop.f32.mrb[0].mxu0
      %718 = vmatprep.mubr.bf16.mxu0 0
      %719 = vmatmul.mubr.bf16.gmra.mrb[0].mxu0 %v401
      %v720 = vpop.f32.mrb[0].mxu0
      %v721 = vadd.f32 %v542, %v720
      %v722 = vpop.f32.mrb[0].mxu0
      %v723 = vpop.f32.mrb[0].mxu0
      %v724 = vadd.f32 %v545, %v723
      %v725 = vpop.f32.mrb[0].mxu0
      %726 = vmatprep.mubr.bf16.mxu0 0
      %727 = vmatmul.mubr.bf16.gmra.mrb[0].mxu0 %v404
      %v728 = vpop.f32.mrb[0].mxu0
      %v729 = vadd.f32 %v550, %v728
      %v730 = vpop.f32.mrb[0].mxu0
      %v731 = vpop.f32.mrb[0].mxu0
      %v732 = vadd.f32 %v553, %v731
      %v733 = vpop.f32.mrb[0].mxu0
      %734 = vmatprep.mubr.bf16.mxu0 0
      %735 = vmatmul.mubr.bf16.gmra.mrb[0].mxu0 %v407
      %v736 = vpop.f32.mrb[0].mxu0
      %v737 = vadd.f32 %v558, %v736
      %v738 = vpop.f32.mrb[0].mxu0
      %v739 = vpop.f32.mrb[0].mxu0
      %v740 = vadd.f32 %v561, %v739
      %v741 = vpop.f32.mrb[0].mxu0
      %742 = vmatprep.mubr.bf16.mxu0 0
      %743 = vmatmul.mubr.bf16.gmra.mrb[0].mxu0 %v410
      %v744 = vpop.f32.mrb[0].mxu0
      %v745 = vadd.f32 %v566, %v744
      %v746 = vpop.f32.mrb[0].mxu0
      %v747 = vpop.f32.mrb[0].mxu0
      %v748 = vadd.f32 %v569, %v747
      %v749 = vpop.f32.mrb[0].mxu0
      %750 = vmatprep.mubr.bf16.mxu0 0
      %751 = vmatmul.mubr.bf16.gmra.mrb[0].mxu0 %v413
      %v752 = vpop.f32.mrb[0].mxu0
      %v753 = vadd.f32 %v574, %v752
      %v754 = vpop.f32.mrb[0].mxu0
      %v755 = vpop.f32.mrb[0].mxu0
      %v756 = vadd.f32 %v577, %v755
      %v757 = vpop.f32.mrb[0].mxu0
      %758 = vdwg.mxu0
      %v759 = vmax.f32 %v633, 0.0
      %v760 = vmax.f32 %v636, 0.0
      %v761 = vmax.f32 %v641, 0.0
      %v762 = vmax.f32 %v644, 0.0
      %v763 = vmax.f32 %v649, 0.0
      %v764 = vmax.f32 %v652, 0.0
      %v765 = vmax.f32 %v657, 0.0
      %v766 = vmax.f32 %v660, 0.0
      %v767 = vmax.f32 %v665, 0.0
      %v768 = vmax.f32 %v668, 0.0
      %v769 = vmax.f32 %v673, 0.0
      %v770 = vmax.f32 %v676, 0.0
      %v771 = vmax.f32 %v681, 0.0
      %v772 = vmax.f32 %v684, 0.0
      %v773 = vmax.f32 %v689, 0.0
      %v774 = vmax.f32 %v692, 0.0
      %v775 = vmax.f32 %v697, 0.0
      %v776 = vmax.f32 %v700, 0.0
      %v777 = vmax.f32 %v705, 0.0
      %v778 = vmax.f32 %v708, 0.0
      %v779 = vmax.f32 %v713, 0.0
      %v780 = vmax.f32 %v716, 0.0
      %v781 = vmax.f32 %v721, 0.0
      %v782 = vmax.f32 %v724, 0.0
      %v783 = vmax.f32 %v729, 0.0
      %v784 = vmax.f32 %v732, 0.0
      %v785 = vmax.f32 %v737, 0.0
      %v786 = vmax.f32 %v740, 0.0
      %v787 = vmax.f32 %v745, 0.0
      %v788 = vmax.f32 %v748, 0.0
      %v789 = vmax.f32 %v753, 0.0
      %v790 = vmax.f32 %v756, 0.0
      %vm791 = vcmask 64512
      %792 = vst.msk [vmem:[%s226] sm:$0xff] %vm791, %v759
      %793 = vst.msk [vmem:[%s226 + $0x8] sm:$0xff] %vm791, %v760
      %794 = vst.msk [vmem:[%s226 + $0x10] sm:$0xff] %vm791, %v761
      %795 = vst.msk [vmem:[%s226 + $0x18] sm:$0xff] %vm791, %v762
      %796 = vst.msk [vmem:[%s226 + $0x20] sm:$0xff] %vm791, %v763
      %797 = vst.msk [vmem:[%s226 + $0x28] sm:$0xff] %vm791, %v764
      %798 = vst.msk [vmem:[%s226 + $0x30] sm:$0xff] %vm791, %v765
      %799 = vst.msk [vmem:[%s226 + $0x38] sm:$0xff] %vm791, %v766
      %800 = vst.msk [vmem:[%s226 + $0x40] sm:$0xff] %vm791, %v767
      %801 = vst.msk [vmem:[%s226 + $0x48] sm:$0xff] %vm791, %v768
      %802 = vst.msk [vmem:[%s226 + $0x50] sm:$0xff] %vm791, %v769
      %803 = vst.msk [vmem:[%s226 + $0x58] sm:$0xff] %vm791, %v770
      %804 = vst.msk [vmem:[%s226 + $0x60] sm:$0xff] %vm791, %v771
      %805 = vst.msk [vmem:[%s226 + $0x68] sm:$0xff] %vm791, %v772
      %806 = vst.msk [vmem:[%s226 + $0x70] sm:$0xff] %vm791, %v773
      %807 = vst.msk [vmem:[%s226 + $0x78] sm:$0xff] %vm791, %v774
      %808 = vst.msk [vmem:[%s226 + $0x80] sm:$0xff] %vm791, %v775
      %809 = vst.msk [vmem:[%s226 + $0x88] sm:$0xff] %vm791, %v776
      %810 = vst.msk [vmem:[%s226 + $0x90] sm:$0xff] %vm791, %v777
      %811 = vst.msk [vmem:[%s226 + $0x98] sm:$0xff] %vm791, %v778
      %812 = vst.msk [vmem:[%s226 + $0xa0] sm:$0xff] %vm791, %v779
      %813 = vst.msk [vmem:[%s226 + $0xa8] sm:$0xff] %vm791, %v780
      %814 = vst.msk [vmem:[%s226 + $0xb0] sm:$0xff] %vm791, %v781
      %815 = vst.msk [vmem:[%s226 + $0xb8] sm:$0xff] %vm791, %v782
      %816 = vst.msk [vmem:[%s226 + $0xc0] sm:$0xff] %vm791, %v783
      %817 = vst.msk [vmem:[%s226 + $0xc8] sm:$0xff] %vm791, %v784
      %818 = vst.msk [vmem:[%s226 + $0xd0] sm:$0xff] %vm791, %v785
      %819 = vst.msk [vmem:[%s226 + $0xd8] sm:$0xff] %vm791, %v786
      %820 = vst.msk [vmem:[%s226 + $0xe0] sm:$0xff] %vm791, %v787
      %821 = vst.msk [vmem:[%s226 + $0xe8] sm:$0xff] %vm791, %v788
      %822 = vst.msk [vmem:[%s226 + $0xf0] sm:$0xff] %vm791, %v789
      %823 = vst.msk [vmem:[%s226 + $0xf8] sm:$0xff] %vm791, %v790
      %s824 = smul.u32 32, %s18
      %p825 = scmp.lt.s32.totalorder %s824, 63
      %s826 = scalar_select %p825, %s824, 63
      %p827 = scmp.lt.s32.totalorder %s19, 0
      %s828 = scalar_select %p827, %s19, 0
      %s829 = sadd.s32 %s828, %s826
      %s830 = smul.addr %s829, 8
      %s831 = scalar_lea.vmem %s3, %s830
      // Predicated region
      $region33: #{bin_conv2d.1} parent=31 // pred_check
        %p832 = pneg %p124
      $region34: #{bin_conv2d.1} parent=31 // pred_check_branch
        %834 = sbr.rel (%p832) target = $region36
      $region35: #{bin_conv2d.1} parent=31 // pred_region
        %s835 = smul.u32 32, %s18
      $region36: #{bin_conv2d.1} parent=31 // pred_fallthru
        _
    $region32: #{bin_conv2d.1} parent=5 // pred_fallthru
      _
    %p836 = scmp.le.s32.totalorder 2, %s9
    // Predicated region
    $region37: #{bin_conv2d.1} parent=5 // pred_check
      %p837 = pneg %p836
    $region38: #{bin_conv2d.1} parent=5 // pred_check_branch
      %839 = sbr.rel (%p837) target = $region40
    $region39: #{bin_conv2d.1} parent=5 // pred_region
      %s840 = ssub.s32 %s9, 2
      // Predicated region
      $region41: #{bin_conv2d.1} parent=39 // pred_check
        %p841 = pneg %p130
      $region42: #{bin_conv2d.1} parent=39 // pred_check_branch
        %843 = sbr.rel (%p841) target = $region44
      $region43: #{bin_conv2d.1} parent=39 // pred_region
        %s844 = smul.u32 32, %s20
        %p845 = scmp.lt.s32.totalorder %s844, 63
        %s846 = scalar_select %p845, %s844, 63
        %p847 = scmp.lt.s32.totalorder %s21, 0
        %s848 = scalar_select %p847, %s21, 0
        %s849 = sadd.s32 %s848, %s846
        %s850 = smul.addr %s849, 8
        %s851 = scalar_lea.vmem %s3, %s850
      $region44: #{bin_conv2d.1} parent=39 // pred_fallthru
        _
    $region40: #{bin_conv2d.1} parent=5 // pred_fallthru
      _
  $region6: #{bin_conv2d.1} parent=0 // loop_footer
    %s13 = sadd.s32 1, %s9
  $region7: #{bin_conv2d.1} parent=0 // loop_footer_branch
    %8 = sbr.rel target = $region3
  $region8: #{bin_conv2d.1} parent=0 // loop_exit
    _

</llo_original>
